<compile_context>
chip_gen: v7x
topology: tpu7x:2x2x1
jax: 0.10.0
libtpu: 0.0.40
codegen_flags: <defaults>
</compile_context>

<pallas_src>
import functools

import jax
import jax.numpy as jnp
from jax import lax
from jax.experimental import pallas as pl
from jax.experimental.pallas import tpu as pltpu

_LANES = 128
_MIN_GRID_STEPS = 8  # keep enough batch tiles for megacore + pipelining (v7x)


def _cdiv(a, b):
    return -(-a // b)


def _round_up(x, m):
    return ((x + m - 1) // m) * m


def _vmem_capacity_bytes():
    try:
        return int(pltpu.get_tpu_info().vmem_capacity_bytes)
    except Exception:
        return 64 << 20  # conservative (v7x-sized) default


def _choose_tiles(b, c, pair_bytes, row_multiple):
    """Pick (tile_rows, tile_cols, vmem_limit_bytes), generation-aware."""
    vmem_cap = _vmem_capacity_bytes()
    if vmem_cap <= (64 << 20):
        # v7x: 64 MiB VMEM, 3.2 TB/s HBM -> ~12 MiB of inputs per pipeline slot
        step_budget = 12 << 20
    else:
        # v5e / v6e: 128 MiB VMEM -> bigger tiles amortize ~0.35 us/step overhead
        step_budget = 24 << 20
    vmem_limit = max(32 << 20, min(vmem_cap * 3 // 4, 96 << 20))

    # Lane (C) tiling: keep whole rows unless even `row_multiple` rows overflow
    # the per-step budget (vocab-scale C); then block C in 128-lane multiples.
    if row_multiple * c * pair_bytes <= step_budget:
        tc = c
    else:
        tc = (step_budget // (row_multiple * pair_bytes) // _LANES) * _LANES
        tc = max(_LANES, min(tc, (c // _LANES) * _LANES))

    # Sublane (batch) tiling.
    if b <= row_multiple:
        tb = b  # full batch extent in one block is always a legal block shape
    else:
        tb = step_budget // max(1, tc * pair_bytes)
        tb = max(row_multiple, (tb // row_multiple) * row_multiple)
        # Keep >= _MIN_GRID_STEPS steps so the "parallel" batch axis feeds both
        # v7x TensorCores and each core still gets DMA/compute overlap.
        tb = min(tb, max(row_multiple,
                         _round_up(_cdiv(b, _MIN_GRID_STEPS), row_multiple)))
        # Never let a block exceed the (floored) batch extent.
        tb = min(tb, max(row_multiple, (b // row_multiple) * row_multiple))
    return tb, tc, int(vmem_limit)


def _ce_partial_kernel(pred_ref, target_ref, out_ref, *, batch, n_cols,
                       mask_rows, mask_cols):
    # pred_ref / target_ref: (TB, TC) tiles (source dtype) in VMEM.
    # out_ref: (1, 128) lane-dense f32 slab, resident across the C grid axis.
    i = pl.program_id(0)
    c = pl.program_id(1)

    @pl.when(c == 0)
    def _init():
        out_ref[...] = jnp.zeros_like(out_ref)

    p = pred_ref[...].astype(jnp.float32)   # upcast AFTER the block DMA
    t = target_ref[...].astype(jnp.float32)
    tb, tc = p.shape

    contrib = t * jnp.log(p)  # one EUP log + one VPU mul per element (no clamp)
    if mask_rows or mask_cols:
        # Select (NOT multiply-by-0/1): OOB rows/lanes of the ragged last tile
        # hold garbage whose log may be NaN/-inf; where() keeps it out.
        valid = None
        if mask_rows:
            row_ids = i * tb + lax.broadcasted_iota(jnp.int32, (tb, tc), 0)
            valid = row_ids < batch
        if mask_cols:
            col_ids = c * tc + lax.broadcasted_iota(jnp.int32, (tb, tc), 1)
            col_ok = col_ids < n_cols
            valid = col_ok if valid is None else (valid & col_ok)
        contrib = jnp.where(valid, contrib, 0.0)

    # Sublane-first reduction: VPU adds over the row axis, then one lane reduce.
    col_sum = jnp.sum(contrib, axis=0, keepdims=True)   # (1, tc)
    partial = -jnp.sum(col_sum)                          # scalar
    out_ref[...] += jnp.full((1, _LANES), partial, dtype=jnp.float32)


def ce_loss(pred, target):
    """pred: (B, C, 1) probabilities, target: (B, C).

    Returns scalar: sum_i -sum(target[i] * log(pred[i].squeeze(-1))) / B,
    identical semantics to the PyTorch CE module with batch_size = B.
    """
    B, C = pred.shape[0], pred.shape[1]
    pred2d = pred.reshape(B, C)   # per-sample squeeze(1); metadata-only reshape
    target2d = target             # keep source dtype; kernel upcasts to f32

    pair_bytes = pred2d.dtype.itemsize + target2d.dtype.itemsize
    min_item = min(pred2d.dtype.itemsize, target2d.dtype.itemsize)
    row_multiple = 8 * max(1, 4 // max(1, min_item))   # 8 f32 / 16 bf16 / 32 i8

    tb, tc, vmem_limit = _choose_tiles(B, C, pair_bytes, row_multiple)
    nb = _cdiv(B, tb)
    nc = _cdiv(C, tc)

    kernel = functools.partial(
        _ce_partial_kernel, batch=B, n_cols=C,
        mask_rows=(nb * tb != B), mask_cols=(nc * tc != C))

    cost = pl.CostEstimate(
        flops=2 * B * C,
        transcendentals=B * C,
        bytes_accessed=int(pair_bytes * B * C + 4 * nb * _LANES))

    partials = pl.pallas_call(
        kernel,
        out_shape=jax.ShapeDtypeStruct((1, nb * _LANES), jnp.float32),
        grid_spec=pltpu.PrefetchScalarGridSpec(
            num_scalar_prefetch=0,
            grid=(nb, nc),                       # reduction (C) axis innermost
            in_specs=[
                pl.BlockSpec((tb, tc), lambda i, c: (i, c)),
                pl.BlockSpec((tb, tc), lambda i, c: (i, c)),
            ],
            out_specs=pl.BlockSpec((1, _LANES), lambda i, c: (0, i)),
        ),
        compiler_params=pltpu.CompilerParams(
            dimension_semantics=("parallel", "arbitrary"),
            vmem_limit_bytes=vmem_limit,
        ),
        cost_estimate=cost,
    )(pred2d, target2d)

    # One representative lane per batch tile; divide by the FULL batch size.
    per_tile = partials.reshape(nb, _LANES)[:, 0]
    return jnp.sum(per_tile) / jnp.float32(B)


if __name__ == "__main__":
    key = jax.random.PRNGKey(0)
    k1, k2, k3, k4 = jax.random.split(key, 4)

    # Case 1: aligned small shapes, matching PyTorch's (B, C, 1) pred layout.
    B, C = 8, 128
    probs = jax.nn.softmax(jax.random.normal(k1, (B, C), dtype=jnp.float32), -1)
    pred = probs.reshape(B, C, 1)
    target = jax.nn.softmax(jax.random.normal(k2, (B, C), dtype=jnp.float32), -1)
    loss = ce_loss(pred, target)
    jax.block_until_ready(loss)
    ref = -jnp.sum(target * jnp.log(probs)) / B
    assert jnp.allclose(loss, ref, rtol=1e-5, atol=1e-5), (loss, ref)

    # Case 2: ragged batch (13 % 8 != 0) + non-128 C exercises the in-kernel mask.
    B2, C2 = 13, 96
    probs2 = jax.nn.softmax(jax.random.normal(k3, (B2, C2), dtype=jnp.float32), -1)
    pred2 = probs2.reshape(B2, C2, 1)
    target2 = jax.nn.softmax(jax.random.normal(k4, (B2, C2), dtype=jnp.float32), -1)
    loss2 = ce_loss(pred2, target2)
    jax.block_until_ready(loss2)
    ref2 = -jnp.sum(target2 * jnp.log(probs2)) / B2
    assert jnp.allclose(loss2, ref2, rtol=1e-5, atol=1e-5), (loss2, ref2)

    print("KERNEL_OK")
</pallas_src>

<mosaic_0001>
module attributes {stable_mosaic.version = 11 : i64} {
  func.func @_ce_partial_kernel(%arg0: i32, %arg1: i32, %arg2: memref<8x128xf32, #tpu.memory_space<vmem>>, %arg3: memref<8x128xf32, #tpu.memory_space<vmem>>, %arg4: memref<1x128xf32, #tpu.memory_space<vmem>>) attributes {dimension_semantics = [#tpu.dimension_semantics<parallel>, #tpu.dimension_semantics<arbitrary>], iteration_bounds = array<i64: 1, 1>, scalar_prefetch = 0 : i64, scratch_operands = 0 : i64, tpu.core_type = #tpu.core_type<tc>, window_params = [{transform_indices = @transform_0, window_bounds = array<i64: 8, 128>}, {transform_indices = @transform_1, window_bounds = array<i64: 8, 128>}, {transform_indices = @transform_2, window_bounds = array<i64: 1, 128>}]} {
    %c0_i32 = arith.constant 0 : i32
    %0 = arith.cmpi eq, %arg1, %c0_i32 : i32
    %1 = arith.extui %0 : i1 to i32
    %c0_i32_0 = arith.constant 0 : i32
    %2 = arith.cmpi ne, %1, %c0_i32_0 : i32
    scf.if %2 {
      %cst_10 = arith.constant 0.000000e+00 : f32
      %18 = vector.broadcast %cst_10 : f32 to vector<1x128xf32>
      %c0_11 = arith.constant 0 : index
      %c0_12 = arith.constant 0 : index
      %19 = vector.load %arg4[%c0_11, %c0_12] : memref<1x128xf32, #tpu.memory_space<vmem>>, vector<1x128xf32>
      tpu.vector_store %arg4[%c0_11, %c0_12], %18 {strides = array<i32>} : memref<1x128xf32, #tpu.memory_space<vmem>>, vector<1x128xf32>,
    } else {
    }
    %c0 = arith.constant 0 : index
    %c0_1 = arith.constant 0 : index
    %3 = vector.load %arg2[%c0, %c0_1] : memref<8x128xf32, #tpu.memory_space<vmem>>, vector<8x128xf32>
    %c0_2 = arith.constant 0 : index
    %c0_3 = arith.constant 0 : index
    %4 = vector.load %arg3[%c0_2, %c0_3] : memref<8x128xf32, #tpu.memory_space<vmem>>, vector<8x128xf32>
    %5 = math.log %3 : vector<8x128xf32>
    %6 = arith.mulf %4, %5 : vector<8x128xf32>
    %cst = arith.constant dense<0.000000e+00> : vector<128xf32>
    %7 = vector.multi_reduction <add>, %6, %cst [0] : vector<8x128xf32> to vector<128xf32>
    %8 = vector.shape_cast %7 : vector<128xf32> to vector<1x128xf32>
    %9 = vector.shape_cast %8 : vector<1x128xf32> to vector<1x1x128xf32>
    %cst_4 = arith.constant dense<0.000000e+00> : vector<1xf32>
    %10 = vector.multi_reduction <add>, %9, %cst_4 [1, 2] : vector<1x1x128xf32> to vector<1xf32>
    %11 = vector.shape_cast %10 : vector<1xf32> to vector<1x1x1xf32>
    %12 = vector.extract %11[0, 0, 0] : f32 from vector<1x1x1xf32>
    %cst_5 = arith.constant 0.000000e+00 : f32
    %13 = arith.subf %cst_5, %12 : f32
    %c0_6 = arith.constant 0 : index
    %c0_7 = arith.constant 0 : index
    %14 = vector.load %arg4[%c0_6, %c0_7] : memref<1x128xf32, #tpu.memory_space<vmem>>, vector<1x128xf32>
    %15 = vector.broadcast %13 : f32 to vector<1x128xf32>
    %16 = arith.addf %14, %15 : vector<1x128xf32>
    %c0_8 = arith.constant 0 : index
    %c0_9 = arith.constant 0 : index
    %17 = vector.load %arg4[%c0_8, %c0_9] : memref<1x128xf32, #tpu.memory_space<vmem>>, vector<1x128xf32>
    tpu.vector_store %arg4[%c0_8, %c0_9], %16 {strides = array<i32>} : memref<1x128xf32, #tpu.memory_space<vmem>>, vector<1x128xf32>,
    return
  }
  func.func @transform_0(%arg0: i32, %arg1: i32) -> (i32, i32) {
    %c0_i32 = arith.constant 0 : i32
    return %arg0, %arg1 : i32, i32
  }
  func.func @transform_1(%arg0: i32, %arg1: i32) -> (i32, i32) {
    %c0_i32 = arith.constant 0 : i32
    return %arg0, %arg1 : i32, i32
  }
  func.func @transform_2(%arg0: i32, %arg1: i32) -> (i32, i32) {
    %c0_i32 = arith.constant 0 : i32
    %c0_i32_0 = arith.constant 0 : i32
    return %c0_i32, %arg0 : i32, i32
  }
}

</mosaic_0001>

<llo_original>
// kernel: tpu_custom_call.1
$region0: #{tpu_custom_call.1}
  #allocation0 [shape = 'u32[]', space=smem, size = 0x4, offset = 0x4, fixed_abs, tag = 'smem constant byte address 0x4 - core index']
  #allocation1 [shape = 'u32[144,128]{1,0:T(1,128)}', space=vmem, size = 0x12000, scoped, tag = 'internal scratch']
  %s0 = inlined_call_operand.hbm [shape: f32[8,128], index: 0, kind: input, shape index: {}]
  %s1 = inlined_call_operand.hbm [shape: f32[8,128], index: 1, kind: input, shape index: {}]
  %s2 = inlined_call_operand.hbm [shape: f32[1,128], index: 2, kind: output, shape index: {}]
  %s3 = sld [smem:[#allocation0]]
  $region30: #{tpu_custom_call.1} parent=0
    _
  %s5 = ssub.s32 1, %s3
  %s6 = scalar_select 0, %s5, %s3
  $region1: #{tpu_custom_call.1} parent=0
    #allocation2 [shape = 'u8[4096]{0}', space=vmem, size = 0x1000, scoped, tag = 'input window, operand 0, single buffered']
    #allocation3 [shape = 's32[1]{0}', space=sflag, size = 0x4, scoped, tag = 'scoped memory for tpu_custom_call.1']
    #allocation4 [shape = 's32[1]{0}', space=sflag, size = 0x4, scoped, tag = 'scoped memory for tpu_custom_call.1']
    #allocation5 [shape = 'u8[4096]{0}', space=vmem, size = 0x1000, scoped, tag = 'input window, operand 1, single buffered']
    #allocation6 [shape = 's32[1]{0}', space=sflag, size = 0x4, scoped, tag = 'scoped memory for tpu_custom_call.1']
    #allocation7 [shape = 'u8[512]{0}', space=vmem, size = 0x400, scoped, tag = 'output window, operand 0, single buffered']
    %7 = vsyncpa [#allocation3], 0
    %8 = vsyncpa [#allocation6], 0
    %9 = vsyncpa [#allocation4], 0
    // Predicated region
    $region2: #{tpu_custom_call.1} parent=1 // pred_check
      _
    $region3: #{tpu_custom_call.1} parent=1 // pred_check_branch
      %11 = sbr.rel (0) target = $region5
    $region4: #{tpu_custom_call.1} parent=1 // pred_region
      %s13 = ssub.s32 128, 128
      %14 = vsyncadd [#allocation3], %s13
      %s16 = sshll.u32 [#allocation2], 4
      %s17 = int_to_ptr.vmem [resolvable:$true] %s16
      %19 = dma.hbm_to_vmem [thread:$0]  %s0, 128, %s17, [#allocation3]
    $region5: #{tpu_custom_call.1} parent=1 // pred_fallthru
      _
    // Predicated region
    $region6: #{tpu_custom_call.1} parent=1 // pred_check
      _
    $region7: #{tpu_custom_call.1} parent=1 // pred_check_branch
      %21 = sbr.rel (0) target = $region9
    $region8: #{tpu_custom_call.1} parent=1 // pred_region
      %s23 = ssub.s32 128, 128
      %24 = vsyncadd [#allocation6], %s23
      %s26 = sshll.u32 [#allocation5], 4
      %s27 = int_to_ptr.vmem [resolvable:$true] %s26
      %29 = dma.hbm_to_vmem [thread:$0]  %s1, 128, %s27, [#allocation6]
    $region9: #{tpu_custom_call.1} parent=1 // pred_fallthru
      _
    // Predicated region
    $region10: #{tpu_custom_call.1} parent=1 // pred_check
      _
    $region11: #{tpu_custom_call.1} parent=1 // pred_check_branch
      %31 = sbr.rel (0) target = $region13
    $region12: #{tpu_custom_call.1} parent=1 // pred_region
      %32 = dma.done [#allocation3], 128
    $region13: #{tpu_custom_call.1} parent=1 // pred_fallthru
      _
    // Predicated region
    $region14: #{tpu_custom_call.1} parent=1 // pred_check
      _
    $region15: #{tpu_custom_call.1} parent=1 // pred_check_branch
      %34 = sbr.rel (0) target = $region17
    $region16: #{tpu_custom_call.1} parent=1 // pred_region
      %35 = dma.done [#allocation6], 128
    $region17: #{tpu_custom_call.1} parent=1 // pred_fallthru
      _
    %p36 = scmp.eq.s32.totalorder 0, 0
    // Predicated region
    $region18: #{tpu_custom_call.1} parent=1 // pred_check
      %p37 = pneg %p36
    $region19: #{tpu_custom_call.1} parent=1 // pred_check_branch
      %39 = sbr.rel (%p37) target = $region21
    $region20: #{tpu_custom_call.1} parent=1 // pred_region
      %40 = vst [vmem:[#allocation7] sm:$0x1] 0.0
    $region21: #{tpu_custom_call.1} parent=1 // pred_fallthru
      _
    %v41 = vld [vmem:[#allocation2] sm:$0xff]
    %v42 = vld [vmem:[#allocation5] sm:$0xff]
    %v43 = vlog2.pop %v41
    %v44 = vmul.f32 %v43, 0.6931472
    %v45 = vmul.f32 %v42, %v44
    %v46 = vrot.slane %v45, 4
    %v47 = vadd.f32 %v45, %v46
    %v48 = vrot.slane %v47, 2
    %v49 = vadd.f32 %v47, %v48
    %v50 = vrot.slane %v49, 1
    %v51 = vadd.f32 %v49, %v50
    %vm52 = vcmask 1040384
    %v53 = vsel %vm52, %v51, 0.0
    %54 = vadd.xlane.f32.xlu0 %v53
    %v55 = vpop.xlane.xlu0 %54
    %v56 = vrot.slane %v55, 4
    %v57 = vadd.f32 %v55, %v56
    %v58 = vrot.slane %v57, 2
    %v59 = vadd.f32 %v57, %v58
    %v60 = vrot.slane %v59, 1
    %v61 = vadd.f32 %v59, %v60
    %s62 = vtos %v61
    %s63 = ssub.f32 0.0, %s62
    %v64 = vld [vmem:[#allocation7] sm:$0x1]
    %v65 = vstv %s63
    %v66 = vadd.f32 %v64, %v65
    %67 = vst [vmem:[#allocation7] sm:$0x1] %v66
    // Predicated region
    $region22: #{tpu_custom_call.1} parent=1 // pred_check
      _
    $region23: #{tpu_custom_call.1} parent=1 // pred_check_branch
      %69 = sbr.rel (0) target = $region25
    $region24: #{tpu_custom_call.1} parent=1 // pred_region
      %s71 = ssub.s32 16, 16
      %72 = vsyncadd [#allocation4], %s71
      %s74 = sshll.u32 [#allocation7], 4
      %s75 = int_to_ptr.vmem [resolvable:$true] %s74
      %77 = dma.vmem_to_hbm [thread:$0]  %s75, 16, %s2, [#allocation4]
    $region25: #{tpu_custom_call.1} parent=1 // pred_fallthru
      _
    // Predicated region
    $region26: #{tpu_custom_call.1} parent=1 // pred_check
      _
    $region27: #{tpu_custom_call.1} parent=1 // pred_check_branch
      %79 = sbr.rel (0) target = $region29
    $region28: #{tpu_custom_call.1} parent=1 // pred_region
      %80 = dma.done [#allocation4], 16
    $region29: #{tpu_custom_call.1} parent=1 // pred_fallthru
      _
    %81 = vsyncpa [#allocation3], 1
    %82 = vsyncpa [#allocation6], 1
    %83 = vsyncpa [#allocation4], 1

</llo_original>
